<compile_context>
chip_gen: v7x
topology: tpu7x:2x2x1
jax: 0.10.0
libtpu: 0.0.40
codegen_flags: <defaults>
</compile_context>

<pallas_src>
import jax
import jax.numpy as jnp
from jax.experimental import pallas as pl
from jax.experimental.pallas import tpu as pltpu

LANE = 128
H1, H2, H3 = 100, 50, 25


def _round_up(x, m):
    return ((x + m - 1) // m) * m


def actor_kernel(x_ref, w_ref, b_ref, out_ref):
    # x_ref:   (BM, K)       obs tile, zero-padded to K lanes (K = obs padded to 128)
    # w_ref:   (K, 4*128)    packed [W1 | W2 | W3 | W4], zero-padded
    # b_ref:   (1, 4*128)    packed [b1 | b2 | b3 | b4], zero-padded
    # out_ref: (BM, 128)     padded action output (real act_dim sliced in wrapper)
    x = x_ref[...]  # already f32, no cast

    # fc1 + ReLU
    h = jnp.dot(x, w_ref[:, 0:LANE], preferred_element_type=jnp.float32)
    h = jnp.maximum(h + b_ref[:, 0:LANE], 0.0)

    # fc2 + ReLU
    h = jnp.dot(h, w_ref[0:LANE, LANE:2 * LANE], preferred_element_type=jnp.float32)
    h = jnp.maximum(h + b_ref[:, LANE:2 * LANE], 0.0)

    # fc3 + ReLU
    h = jnp.dot(h, w_ref[0:LANE, 2 * LANE:3 * LANE], preferred_element_type=jnp.float32)
    h = jnp.maximum(h + b_ref[:, 2 * LANE:3 * LANE], 0.0)

    # fc4 + tanh (tanh goes to the EUP slot -> effectively free next to MXU/VPU)
    h = jnp.dot(h, w_ref[0:LANE, 3 * LANE:4 * LANE], preferred_element_type=jnp.float32)
    out_ref[...] = jnp.tanh(h + b_ref[:, 3 * LANE:4 * LANE])


def pack_params(params, obs_dim, act_dim):
    """Zero-pad every layer to 128 lanes and pack into one weight + one bias slab."""
    K = _round_up(max(obs_dim, LANE), LANE)
    w_slab = jnp.zeros((K, 4 * LANE), jnp.float32)
    b_slab = jnp.zeros((1, 4 * LANE), jnp.float32)

    w_slab = w_slab.at[:obs_dim, 0:H1].set(params["w1"])
    w_slab = w_slab.at[:H1, LANE:LANE + H2].set(params["w2"])
    w_slab = w_slab.at[:H2, 2 * LANE:2 * LANE + H3].set(params["w3"])
    w_slab = w_slab.at[:H3, 3 * LANE:3 * LANE + act_dim].set(params["w4"])

    b_slab = b_slab.at[0, 0:H1].set(params["b1"])
    b_slab = b_slab.at[0, LANE:LANE + H2].set(params["b2"])
    b_slab = b_slab.at[0, 2 * LANE:2 * LANE + H3].set(params["b3"])
    b_slab = b_slab.at[0, 3 * LANE:3 * LANE + act_dim].set(params["b4"])
    return w_slab, b_slab, K


def actor_forward(x, params, *, block_m=512):
    """x: [B, obs_dim] float32. Returns [B, act_dim] float32."""
    B, obs_dim = x.shape
    act_dim = params["w4"].shape[1]

    w_slab, b_slab, K = pack_params(params, obs_dim, act_dim)

    # Batch tile: multiple of 8 sublanes, capped at block_m (safe for v7x VMEM:
    # 2 bufs * (BM*K + BM*128) * 4B  ~= 0.5 MiB at BM=512, K=128).
    BM = min(block_m, _round_up(B, 8))
    B_pad = _round_up(B, BM)

    x_pad = jnp.zeros((B_pad, K), jnp.float32).at[:B, :obs_dim].set(x)

    flops = 2 * B * (obs_dim * H1 + H1 * H2 + H2 * H3 + H3 * act_dim)
    bytes_accessed = 4 * (B_pad * K + B_pad * LANE + w_slab.size + b_slab.size)
    cost = pl.CostEstimate(flops=flops,
                           transcendentals=B * act_dim,
                           bytes_accessed=bytes_accessed)

    out_pad = pl.pallas_call(
        actor_kernel,
        out_shape=jax.ShapeDtypeStruct((B_pad, LANE), jnp.float32),
        grid=(B_pad // BM,),
        in_specs=[
            pl.BlockSpec((BM, K), lambda i: (i, 0)),          # x tiles pipeline
            pl.BlockSpec((K, 4 * LANE), lambda i: (0, 0)),    # weights stay resident
            pl.BlockSpec((1, 4 * LANE), lambda i: (0, 0)),    # biases stay resident
        ],
        out_specs=pl.BlockSpec((BM, LANE), lambda i: (i, 0)),
        compiler_params=pltpu.CompilerParams(
            dimension_semantics=("parallel",)),               # v7x: shard batch over 2 TCs
        cost_estimate=cost,
    )(x_pad, w_slab, b_slab)

    return out_pad[:B, :act_dim]


def init_params(key, obs_dim, act_dim):
    """Deterministic init mirroring nn.Linear default (uniform +- 1/sqrt(fan_in))."""
    dims = [(obs_dim, H1), (H1, H2), (H2, H3), (H3, act_dim)]
    params = {}
    for i, (fan_in, fan_out) in enumerate(dims, start=1):
        key, kw, kb = jax.random.split(key, 3)
        bound = 1.0 / (fan_in ** 0.5)
        params[f"w{i}"] = jax.random.uniform(
            kw, (fan_in, fan_out), jnp.float32, -bound, bound)
        params[f"b{i}"] = jax.random.uniform(
            kb, (fan_out,), jnp.float32, -bound, bound)
    return params


def reference_forward(x, p):
    h = jnp.maximum(x @ p["w1"] + p["b1"], 0.0)
    h = jnp.maximum(h @ p["w2"] + p["b2"], 0.0)
    h = jnp.maximum(h @ p["w3"] + p["b3"], 0.0)
    return jnp.tanh(h @ p["w4"] + p["b4"])


if __name__ == "__main__":
    key = jax.random.PRNGKey(0)
    obs_dim, act_dim = 16, 4

    kx, kp, kx2 = jax.random.split(key, 3)
    params = init_params(kp, obs_dim, act_dim)

    # Small smoke test (single grid step).
    batch = 8
    x = jax.random.normal(kx, (batch, obs_dim), jnp.float32)
    out = jax.block_until_ready(actor_forward(x, params))
    ref = reference_forward(x, params)
    assert out.shape == (batch, act_dim)
    assert jnp.allclose(out, ref, atol=1e-5, rtol=1e-5), "mismatch vs JAX reference (B=8)"

    # Larger, non-multiple batch to exercise the batch grid + padding/slicing path.
    batch2 = 300
    x2 = jax.random.normal(kx2, (batch2, obs_dim), jnp.float32)
    out2 = jax.block_until_ready(actor_forward(x2, params, block_m=128))  # grid=(3,)
    ref2 = reference_forward(x2, params)
    assert out2.shape == (batch2, act_dim)
    assert jnp.allclose(out2, ref2, atol=1e-5, rtol=1e-5), "mismatch vs JAX reference (B=300)"

    print("KERNEL_OK")
</pallas_src>

<mosaic_0001>
module attributes {stable_mosaic.version = 11 : i64} {
  func.func @actor_kernel(%arg0: i32, %arg1: memref<8x128xf32, #tpu.memory_space<vmem>>, %arg2: memref<128x512xf32, #tpu.memory_space<vmem>>, %arg3: memref<1x512xf32, #tpu.memory_space<vmem>>, %arg4: memref<8x128xf32, #tpu.memory_space<vmem>>) attributes {dimension_semantics = [#tpu.dimension_semantics<parallel>], iteration_bounds = array<i64: 1>, scalar_prefetch = 0 : i64, scratch_operands = 0 : i64, tpu.core_type = #tpu.core_type<tc>, window_params = [{transform_indices = @transform_0, window_bounds = array<i64: 8, 128>}, {pipeline_mode = #tpu.pipeline_mode<synchronous>, transform_indices = @transform_1, window_bounds = array<i64: 128, 512>}, {pipeline_mode = #tpu.pipeline_mode<synchronous>, transform_indices = @transform_2, window_bounds = array<i64: 1, 512>}, {transform_indices = @transform_3, window_bounds = array<i64: 8, 128>}]} {
    %c0 = arith.constant 0 : index
    %c0_0 = arith.constant 0 : index
    %0 = vector.load %arg1[%c0, %c0_0] : memref<8x128xf32, #tpu.memory_space<vmem>>, vector<8x128xf32>
    %c0_1 = arith.constant 0 : index
    %c0_2 = arith.constant 0 : index
    %1 = vector.load %arg2[%c0_1, %c0_2] : memref<128x512xf32, #tpu.memory_space<vmem>>, vector<128x128xf32>
    %cst = arith.constant dense<0.000000e+00> : vector<8x128xf32>
    %2 = tpu.matmul %0, %1, %cst {dimension_numbers = #tpu.dot_dimension_numbers<[1], [0], [0], [1], [0, 0, 1, 1], [], []>} : vector<8x128xf32>, vector<128x128xf32>, vector<8x128xf32> -> vector<8x128xf32>
    %c0_3 = arith.constant 0 : index
    %c0_4 = arith.constant 0 : index
    %3 = vector.load %arg3[%c0_3, %c0_4] : memref<1x512xf32, #tpu.memory_space<vmem>>, vector<1x128xf32>
    %4 = vector.broadcast %3 : vector<1x128xf32> to vector<8x128xf32>
    %5 = arith.addf %2, %4 : vector<8x128xf32>
    %cst_5 = arith.constant 0.000000e+00 : f32
    %6 = vector.broadcast %cst_5 : f32 to vector<8x128xf32>
    %7 = arith.maximumf %5, %6 : vector<8x128xf32>
    %c0_6 = arith.constant 0 : index
    %c128 = arith.constant 128 : index
    %8 = vector.load %arg2[%c0_6, %c128] : memref<128x512xf32, #tpu.memory_space<vmem>>, vector<128x128xf32>
    %cst_7 = arith.constant dense<0.000000e+00> : vector<8x128xf32>
    %9 = tpu.matmul %7, %8, %cst_7 {dimension_numbers = #tpu.dot_dimension_numbers<[1], [0], [0], [1], [0, 0, 1, 1], [], []>} : vector<8x128xf32>, vector<128x128xf32>, vector<8x128xf32> -> vector<8x128xf32>
    %c0_8 = arith.constant 0 : index
    %c128_9 = arith.constant 128 : index
    %10 = vector.load %arg3[%c0_8, %c128_9] : memref<1x512xf32, #tpu.memory_space<vmem>>, vector<1x128xf32>
    %11 = vector.broadcast %10 : vector<1x128xf32> to vector<8x128xf32>
    %12 = arith.addf %9, %11 : vector<8x128xf32>
    %cst_10 = arith.constant 0.000000e+00 : f32
    %13 = vector.broadcast %cst_10 : f32 to vector<8x128xf32>
    %14 = arith.maximumf %12, %13 : vector<8x128xf32>
    %c0_11 = arith.constant 0 : index
    %c256 = arith.constant 256 : index
    %15 = vector.load %arg2[%c0_11, %c256] : memref<128x512xf32, #tpu.memory_space<vmem>>, vector<128x128xf32>
    %cst_12 = arith.constant dense<0.000000e+00> : vector<8x128xf32>
    %16 = tpu.matmul %14, %15, %cst_12 {dimension_numbers = #tpu.dot_dimension_numbers<[1], [0], [0], [1], [0, 0, 1, 1], [], []>} : vector<8x128xf32>, vector<128x128xf32>, vector<8x128xf32> -> vector<8x128xf32>
    %c0_13 = arith.constant 0 : index
    %c256_14 = arith.constant 256 : index
    %17 = vector.load %arg3[%c0_13, %c256_14] : memref<1x512xf32, #tpu.memory_space<vmem>>, vector<1x128xf32>
    %18 = vector.broadcast %17 : vector<1x128xf32> to vector<8x128xf32>
    %19 = arith.addf %16, %18 : vector<8x128xf32>
    %cst_15 = arith.constant 0.000000e+00 : f32
    %20 = vector.broadcast %cst_15 : f32 to vector<8x128xf32>
    %21 = arith.maximumf %19, %20 : vector<8x128xf32>
    %c0_16 = arith.constant 0 : index
    %c384 = arith.constant 384 : index
    %22 = vector.load %arg2[%c0_16, %c384] : memref<128x512xf32, #tpu.memory_space<vmem>>, vector<128x128xf32>
    %cst_17 = arith.constant dense<0.000000e+00> : vector<8x128xf32>
    %23 = tpu.matmul %21, %22, %cst_17 {dimension_numbers = #tpu.dot_dimension_numbers<[1], [0], [0], [1], [0, 0, 1, 1], [], []>} : vector<8x128xf32>, vector<128x128xf32>, vector<8x128xf32> -> vector<8x128xf32>
    %c0_18 = arith.constant 0 : index
    %c384_19 = arith.constant 384 : index
    %24 = vector.load %arg3[%c0_18, %c384_19] : memref<1x512xf32, #tpu.memory_space<vmem>>, vector<1x128xf32>
    %25 = vector.broadcast %24 : vector<1x128xf32> to vector<8x128xf32>
    %26 = arith.addf %23, %25 : vector<8x128xf32>
    %27 = math.tanh %26 : vector<8x128xf32>
    %c0_20 = arith.constant 0 : index
    %c0_21 = arith.constant 0 : index
    %28 = vector.load %arg4[%c0_20, %c0_21] : memref<8x128xf32, #tpu.memory_space<vmem>>, vector<8x128xf32>
    tpu.vector_store %arg4[%c0_20, %c0_21], %27 {strides = array<i32>} : memref<8x128xf32, #tpu.memory_space<vmem>>, vector<8x128xf32>,
    return
  }
  func.func @transform_0(%arg0: i32) -> (i32, i32) {
    %c0_i32 = arith.constant 0 : i32
    %c0_i32_0 = arith.constant 0 : i32
    return %arg0, %c0_i32 : i32, i32
  }
  func.func @transform_1(%arg0: i32) -> (i32, i32) {
    %c0_i32 = arith.constant 0 : i32
    %c0_i32_0 = arith.constant 0 : i32
    %c0_i32_1 = arith.constant 0 : i32
    return %c0_i32, %c0_i32_0 : i32, i32
  }
  func.func @transform_2(%arg0: i32) -> (i32, i32) {
    %c0_i32 = arith.constant 0 : i32
    %c0_i32_0 = arith.constant 0 : i32
    %c0_i32_1 = arith.constant 0 : i32
    return %c0_i32, %c0_i32_0 : i32, i32
  }
  func.func @transform_3(%arg0: i32) -> (i32, i32) {
    %c0_i32 = arith.constant 0 : i32
    %c0_i32_0 = arith.constant 0 : i32
    return %arg0, %c0_i32 : i32, i32
  }
}

</mosaic_0001>

<llo_original>
// kernel: tpu_custom_call.1
$region0: #{tpu_custom_call.1}
  #allocation0 [shape = 'u32[]', space=smem, size = 0x4, offset = 0x4, fixed_abs, tag = 'smem constant byte address 0x4 - core index']
  #allocation1 [shape = 'u32[144,128]{1,0:T(1,128)}', space=vmem, size = 0x12000, scoped, tag = 'internal scratch']
  %s0 = inlined_call_operand.hbm [shape: f32[8,128], index: 0, kind: input, shape index: {}]
  %s1 = inlined_call_operand.hbm [shape: f32[128,512], index: 1, kind: input, shape index: {}]
  %s2 = inlined_call_operand.vmem [shape: f32[1,512], index: 2, kind: input, shape index: {}]
  %s3 = inlined_call_operand.hbm [shape: f32[8,128], index: 3, kind: output, shape index: {}]
  %s4 = sld [smem:[#allocation0]]
  $region30: #{tpu_custom_call.1} parent=0
    _
  %s6 = ssub.s32 1, %s4
  %s7 = scalar_select 0, %s6, %s4
  $region1: #{tpu_custom_call.1} parent=0
    #allocation2 [shape = 'u8[4096]{0}', space=vmem, size = 0x1000, scoped, tag = 'input window, operand 0, single buffered']
    #allocation3 [shape = 's32[1]{0}', space=sflag, size = 0x4, scoped, tag = 'scoped memory for tpu_custom_call.1']
    #allocation4 [shape = 's32[1]{0}', space=sflag, size = 0x4, scoped, tag = 'scoped memory for tpu_custom_call.1']
    #allocation5 [shape = 'u8[262144]{0}', space=vmem, size = 0x40000, scoped, tag = 'input window, operand 1, single buffered']
    #allocation6 [shape = 's32[1]{0}', space=sflag, size = 0x4, scoped, tag = 'scoped memory for tpu_custom_call.1']
    #allocation7 [shape = 'u8[4096]{0}', space=vmem, size = 0x1000, scoped, tag = 'output window, operand 0, single buffered']
    %8 = vsyncpa [#allocation3], 0
    %9 = vsyncpa [#allocation6], 0
    %10 = vsyncpa [#allocation4], 0
    // Predicated region
    $region2: #{tpu_custom_call.1} parent=1 // pred_check
      _
    $region3: #{tpu_custom_call.1} parent=1 // pred_check_branch
      %12 = sbr.rel (0) target = $region5
    $region4: #{tpu_custom_call.1} parent=1 // pred_region
      %s14 = ssub.s32 128, 128
      %15 = vsyncadd [#allocation3], %s14
      %s17 = sshll.u32 [#allocation2], 4
      %s18 = int_to_ptr.vmem [resolvable:$true] %s17
      %20 = dma.hbm_to_vmem [thread:$0]  %s0, 128, %s18, [#allocation3]
    $region5: #{tpu_custom_call.1} parent=1 // pred_fallthru
      _
    // Predicated region
    $region6: #{tpu_custom_call.1} parent=1 // pred_check
      _
    $region7: #{tpu_custom_call.1} parent=1 // pred_check_branch
      %22 = sbr.rel (0) target = $region9
    $region8: #{tpu_custom_call.1} parent=1 // pred_region
      %s24 = ssub.s32 8192, 8192
      %25 = vsyncadd [#allocation6], %s24
      %s26 = sshll.u32 [#allocation5], 4
      %s27 = int_to_ptr.vmem [resolvable:$true] %s26
      %32 = dma.hbm_to_vmem [thread:$0]  %s1, 8192, %s27, [#allocation6], 512, 512, 32
    $region9: #{tpu_custom_call.1} parent=1 // pred_fallthru
      _
    // Predicated region
    $region10: #{tpu_custom_call.1} parent=1 // pred_check
      _
    $region11: #{tpu_custom_call.1} parent=1 // pred_check_branch
      %34 = sbr.rel (0) target = $region13
    $region12: #{tpu_custom_call.1} parent=1 // pred_region
      _
    $region13: #{tpu_custom_call.1} parent=1 // pred_fallthru
      _
    // Predicated region
    $region14: #{tpu_custom_call.1} parent=1 // pred_check
      _
    $region15: #{tpu_custom_call.1} parent=1 // pred_check_branch
      %36 = sbr.rel (0) target = $region17
    $region16: #{tpu_custom_call.1} parent=1 // pred_region
      %37 = dma.done [#allocation3], 128
    $region17: #{tpu_custom_call.1} parent=1 // pred_fallthru
      _
    // Predicated region
    $region18: #{tpu_custom_call.1} parent=1 // pred_check
      _
    $region19: #{tpu_custom_call.1} parent=1 // pred_check_branch
      %39 = sbr.rel (0) target = $region21
    $region20: #{tpu_custom_call.1} parent=1 // pred_region
      %40 = dma.done [#allocation6], 8192
    $region21: #{tpu_custom_call.1} parent=1 // pred_fallthru
      _
    %v41 = vld [vmem:[#allocation2] sm:$0xff]
    %v42 = vld [vmem:[#allocation5] sm:$0xff]
    %v43 = vld [vmem:[#allocation5 + $0x20] sm:$0xff]
    %v44 = vld [vmem:[#allocation5 + $0x40] sm:$0xff]
    %v45 = vld [vmem:[#allocation5 + $0x60] sm:$0xff]
    %v46 = vld [vmem:[#allocation5 + $0x80] sm:$0xff]
    %v47 = vld [vmem:[#allocation5 + $0xa0] sm:$0xff]
    %v48 = vld [vmem:[#allocation5 + $0xc0] sm:$0xff]
    %v49 = vld [vmem:[#allocation5 + $0xe0] sm:$0xff]
    %v50 = vld [vmem:[#allocation5 + $0x100] sm:$0xff]
    %v51 = vld [vmem:[#allocation5 + $0x120] sm:$0xff]
    %v52 = vld [vmem:[#allocation5 + $0x140] sm:$0xff]
    %v53 = vld [vmem:[#allocation5 + $0x160] sm:$0xff]
    %v54 = vld [vmem:[#allocation5 + $0x180] sm:$0xff]
    %v55 = vld [vmem:[#allocation5 + $0x1a0] sm:$0xff]
    %v56 = vld [vmem:[#allocation5 + $0x1c0] sm:$0xff]
    %v57 = vld [vmem:[#allocation5 + $0x1e0] sm:$0xff]
    %v58 = vld [vmem:[%s2] sm:$0x1]
    %v60 = vlaneseq
    %v61 = vshrl.u32 %v60, 7
    %v62 = vsub.s32 0, %v61
    %v63 = vrot.slane %v58, %v62
    %65 = vmatprep.subr.mxu0 0.0
    %66 = vmatpush1.msra.mxu0 %v42
    %67 = vmatprep.subr.mxu0 0.0
    %68 = vmatpush1.msra.mxu0 %v43
    %69 = vmatprep.subr.mxu0 0.0
    %70 = vmatpush1.msra.mxu0 %v44
    %71 = vmatprep.subr.mxu0 0.0
    %72 = vmatpush1.msra.mxu0 %v45
    %73 = vmatprep.subr.mxu0 0.0
    %74 = vmatpush1.msra.mxu0 %v46
    %75 = vmatprep.subr.mxu0 0.0
    %76 = vmatpush1.msra.mxu0 %v47
    %77 = vmatprep.subr.mxu0 0.0
    %78 = vmatpush1.msra.mxu0 %v48
    %79 = vmatprep.subr.mxu0 0.0
    %80 = vmatpush1.msra.mxu0 %v49
    %81 = vmatprep.subr.mxu0 0.0
    %82 = vmatpush1.msra.mxu0 %v50
    %83 = vmatprep.subr.mxu0 0.0
    %84 = vmatpush1.msra.mxu0 %v51
    %85 = vmatprep.subr.mxu0 0.0
    %86 = vmatpush1.msra.mxu0 %v52
    %87 = vmatprep.subr.mxu0 0.0
    %88 = vmatpush1.msra.mxu0 %v53
    %89 = vmatprep.subr.mxu0 0.0
    %90 = vmatpush1.msra.mxu0 %v54
    %91 = vmatprep.subr.mxu0 0.0
    %92 = vmatpush1.msra.mxu0 %v55
    %93 = vmatprep.subr.mxu0 0.0
    %94 = vmatpush1.msra.mxu0 %v56
    %95 = vmatprep.subr.mxu0 0.0
    %96 = vmatpush1.msra.mxu0 %v57
    %97 = vmatprep.subr.mxu0 0.0
    %98 = vmatpush1.msra.mxu0 0.0
    %99 = vmatprep.subr.mxu0 0.0
    %100 = vmatpush1.msra.mxu0 0.0
    %101 = vmatprep.subr.mxu0 0.0
    %102 = vmatpush1.msra.mxu0 0.0
    %103 = vmatprep.subr.mxu0 0.0
    %104 = vmatpush1.msra.mxu0 0.0
    %105 = vmatprep.subr.mxu0 0.0
    %106 = vmatpush1.msra.mxu0 0.0
    %107 = vmatprep.subr.mxu0 0.0
    %108 = vmatpush1.msra.mxu0 0.0
    %109 = vmatprep.subr.mxu0 0.0
    %110 = vmatpush1.msra.mxu0 0.0
    %111 = vmatprep.subr.mxu0 0.0
    %112 = vmatpush1.msra.mxu0 0.0
    %113 = vmatprep.subr.mxu0 0.0
    %114 = vmatpush1.msra.mxu0 0.0
    %115 = vmatprep.subr.mxu0 0.0
    %116 = vmatpush1.msra.mxu0 0.0
    %117 = vmatprep.subr.mxu0 0.0
    %118 = vmatpush1.msra.mxu0 0.0
    %119 = vmatprep.subr.mxu0 0.0
    %120 = vmatpush1.msra.mxu0 0.0
    %121 = vmatprep.subr.mxu0 0.0
    %122 = vmatpush1.msra.mxu0 0.0
    %123 = vmatprep.subr.mxu0 0.0
    %124 = vmatpush1.msra.mxu0 0.0
    %125 = vmatprep.subr.mxu0 0.0
    %126 = vmatpush1.msra.mxu0 0.0
    %127 = vmatprep.subr.mxu0 0.0
    %128 = vmatpush1.msra.mxu0 0.0
    %129 = vmatprep.mubr.f32.mxu0 0.0
    %130 = vmatmul.mubr.f32.gmra.mrb[0].mxu0 %v41
    %v131 = vpop.f32.mrb[0].mxu0
    %v132 = vadd.f32 %v63, %v131
    %v133 = vpop.f32.mrb[0].mxu0
    %134 = vdwg.mxu0
    %v135 = vmax.f32 %v132, 0.0
    %v136 = vld [vmem:[#allocation5 + $0x8] sm:$0xff]
    %v137 = vld [vmem:[#allocation5 + $0x28] sm:$0xff]
    %v138 = vld [vmem:[#allocation5 + $0x48] sm:$0xff]
    %v139 = vld [vmem:[#allocation5 + $0x68] sm:$0xff]
    %v140 = vld [vmem:[#allocation5 + $0x88] sm:$0xff]
    %v141 = vld [vmem:[#allocation5 + $0xa8] sm:$0xff]
    %v142 = vld [vmem:[#allocation5 + $0xc8] sm:$0xff]
    %v143 = vld [vmem:[#allocation5 + $0xe8] sm:$0xff]
    %v144 = vld [vmem:[#allocation5 + $0x108] sm:$0xff]
    %v145 = vld [vmem:[#allocation5 + $0x128] sm:$0xff]
    %v146 = vld [vmem:[#allocation5 + $0x148] sm:$0xff]
    %v147 = vld [vmem:[#allocation5 + $0x168] sm:$0xff]
    %v148 = vld [vmem:[#allocation5 + $0x188] sm:$0xff]
    %v149 = vld [vmem:[#allocation5 + $0x1a8] sm:$0xff]
    %v150 = vld [vmem:[#allocation5 + $0x1c8] sm:$0xff]
    %v151 = vld [vmem:[#allocation5 + $0x1e8] sm:$0xff]
    %v152 = vld [vmem:[%s2 + $0x1] sm:$0x1]
    %v154 = vlaneseq
    %v155 = vshrl.u32 %v154, 7
    %v156 = vsub.s32 0, %v155
    %v157 = vrot.slane %v152, %v156
    %159 = vmatprep.subr.mxu0 0.0
    %160 = vmatpush1.msra.mxu0 %v136
    %161 = vmatprep.subr.mxu0 0.0
    %162 = vmatpush1.msra.mxu0 %v137
    %163 = vmatprep.subr.mxu0 0.0
    %164 = vmatpush1.msra.mxu0 %v138
    %165 = vmatprep.subr.mxu0 0.0
    %166 = vmatpush1.msra.mxu0 %v139
    %167 = vmatprep.subr.mxu0 0.0
    %168 = vmatpush1.msra.mxu0 %v140
    %169 = vmatprep.subr.mxu0 0.0
    %170 = vmatpush1.msra.mxu0 %v141
    %171 = vmatprep.subr.mxu0 0.0
    %172 = vmatpush1.msra.mxu0 %v142
    %173 = vmatprep.subr.mxu0 0.0
    %174 = vmatpush1.msra.mxu0 %v143
    %175 = vmatprep.subr.mxu0 0.0
    %176 = vmatpush1.msra.mxu0 %v144
    %177 = vmatprep.subr.mxu0 0.0
    %178 = vmatpush1.msra.mxu0 %v145
    %179 = vmatprep.subr.mxu0 0.0
    %180 = vmatpush1.msra.mxu0 %v146
    %181 = vmatprep.subr.mxu0 0.0
    %182 = vmatpush1.msra.mxu0 %v147
    %183 = vmatprep.subr.mxu0 0.0
    %184 = vmatpush1.msra.mxu0 %v148
    %185 = vmatprep.subr.mxu0 0.0
    %186 = vmatpush1.msra.mxu0 %v149
    %187 = vmatprep.subr.mxu0 0.0
    %188 = vmatpush1.msra.mxu0 %v150
    %189 = vmatprep.subr.mxu0 0.0
    %190 = vmatpush1.msra.mxu0 %v151
    %191 = vmatprep.subr.mxu0 0.0
    %192 = vmatpush1.msra.mxu0 0.0
    %193 = vmatprep.subr.mxu0 0.0
    %194 = vmatpush1.msra.mxu0 0.0
    %195 = vmatprep.subr.mxu0 0.0
    %196 = vmatpush1.msra.mxu0 0.0
    %197 = vmatprep.subr.mxu0 0.0
    %198 = vmatpush1.msra.mxu0 0.0
    %199 = vmatprep.subr.mxu0 0.0
    %200 = vmatpush1.msra.mxu0 0.0
    %201 = vmatprep.subr.mxu0 0.0
    %202 = vmatpush1.msra.mxu0 0.0
    %203 = vmatprep.subr.mxu0 0.0
    %204 = vmatpush1.msra.mxu0 0.0
    %205 = vmatprep.subr.mxu0 0.0
    %206 = vmatpush1.msra.mxu0 0.0
    %207 = vmatprep.subr.mxu0 0.0
    %208 = vmatpush1.msra.mxu0 0.0
    %209 = vmatprep.subr.mxu0 0.0
    %210 = vmatpush1.msra.mxu0 0.0
    %211 = vmatprep.subr.mxu0 0.0
    %212 = vmatpush1.msra.mxu0 0.0
    %213 = vmatprep.subr.mxu0 0.0
    %214 = vmatpush1.msra.mxu0 0.0
    %215 = vmatprep.subr.mxu0 0.0
    %216 = vmatpush1.msra.mxu0 0.0
    %217 = vmatprep.subr.mxu0 0.0
    %218 = vmatpush1.msra.mxu0 0.0
    %219 = vmatprep.subr.mxu0 0.0
    %220 = vmatpush1.msra.mxu0 0.0
    %221 = vmatprep.subr.mxu0 0.0
    %222 = vmatpush1.msra.mxu0 0.0
    %223 = vmatprep.mubr.f32.mxu0 0.0
    %224 = vmatmul.mubr.f32.gmra.mrb[0].mxu0 %v135
    %v225 = vpop.f32.mrb[0].mxu0
    %v226 = vadd.f32 %v157, %v225
    %v227 = vpop.f32.mrb[0].mxu0
    %228 = vdwg.mxu0
    %v229 = vmax.f32 %v226, 0.0
    %v230 = vld [vmem:[#allocation5 + $0x10] sm:$0xff]
    %v231 = vld [vmem:[#allocation5 + $0x30] sm:$0xff]
    %v232 = vld [vmem:[#allocation5 + $0x50] sm:$0xff]
    %v233 = vld [vmem:[#allocation5 + $0x70] sm:$0xff]
    %v234 = vld [vmem:[#allocation5 + $0x90] sm:$0xff]
    %v235 = vld [vmem:[#allocation5 + $0xb0] sm:$0xff]
    %v236 = vld [vmem:[#allocation5 + $0xd0] sm:$0xff]
    %v237 = vld [vmem:[#allocation5 + $0xf0] sm:$0xff]
    %v238 = vld [vmem:[#allocation5 + $0x110] sm:$0xff]
    %v239 = vld [vmem:[#allocation5 + $0x130] sm:$0xff]
    %v240 = vld [vmem:[#allocation5 + $0x150] sm:$0xff]
    %v241 = vld [vmem:[#allocation5 + $0x170] sm:$0xff]
    %v242 = vld [vmem:[#allocation5 + $0x190] sm:$0xff]
    %v243 = vld [vmem:[#allocation5 + $0x1b0] sm:$0xff]
    %v244 = vld [vmem:[#allocation5 + $0x1d0] sm:$0xff]
    %v245 = vld [vmem:[#allocation5 + $0x1f0] sm:$0xff]
    %v246 = vld [vmem:[%s2 + $0x2] sm:$0x1]
    %v248 = vlaneseq
    %v249 = vshrl.u32 %v248, 7
    %v250 = vsub.s32 0, %v249
    %v251 = vrot.slane %v246, %v250
    %253 = vmatprep.subr.mxu0 0.0
    %254 = vmatpush1.msra.mxu0 %v230
    %255 = vmatprep.subr.mxu0 0.0
    %256 = vmatpush1.msra.mxu0 %v231
    %257 = vmatprep.subr.mxu0 0.0
    %258 = vmatpush1.msra.mxu0 %v232
    %259 = vmatprep.subr.mxu0 0.0
    %260 = vmatpush1.msra.mxu0 %v233
    %261 = vmatprep.subr.mxu0 0.0
    %262 = vmatpush1.msra.mxu0 %v234
    %263 = vmatprep.subr.mxu0 0.0
    %264 = vmatpush1.msra.mxu0 %v235
    %265 = vmatprep.subr.mxu0 0.0
    %266 = vmatpush1.msra.mxu0 %v236
    %267 = vmatprep.subr.mxu0 0.0
    %268 = vmatpush1.msra.mxu0 %v237
    %269 = vmatprep.subr.mxu0 0.0
    %270 = vmatpush1.msra.mxu0 %v238
    %271 = vmatprep.subr.mxu0 0.0
    %272 = vmatpush1.msra.mxu0 %v239
    %273 = vmatprep.subr.mxu0 0.0
    %274 = vmatpush1.msra.mxu0 %v240
    %275 = vmatprep.subr.mxu0 0.0
    %276 = vmatpush1.msra.mxu0 %v241
    %277 = vmatprep.subr.mxu0 0.0
    %278 = vmatpush1.msra.mxu0 %v242
    %279 = vmatprep.subr.mxu0 0.0
    %280 = vmatpush1.msra.mxu0 %v243
    %281 = vmatprep.subr.mxu0 0.0
    %282 = vmatpush1.msra.mxu0 %v244
    %283 = vmatprep.subr.mxu0 0.0
    %284 = vmatpush1.msra.mxu0 %v245
    %285 = vmatprep.subr.mxu0 0.0
    %286 = vmatpush1.msra.mxu0 0.0
    %287 = vmatprep.subr.mxu0 0.0
    %288 = vmatpush1.msra.mxu0 0.0
    %289 = vmatprep.subr.mxu0 0.0
    %290 = vmatpush1.msra.mxu0 0.0
    %291 = vmatprep.subr.mxu0 0.0
    %292 = vmatpush1.msra.mxu0 0.0
    %293 = vmatprep.subr.mxu0 0.0
    %294 = vmatpush1.msra.mxu0 0.0
    %295 = vmatprep.subr.mxu0 0.0
    %296 = vmatpush1.msra.mxu0 0.0
    %297 = vmatprep.subr.mxu0 0.0
    %298 = vmatpush1.msra.mxu0 0.0
    %299 = vmatprep.subr.mxu0 0.0
    %300 = vmatpush1.msra.mxu0 0.0
    %301 = vmatprep.subr.mxu0 0.0
    %302 = vmatpush1.msra.mxu0 0.0
    %303 = vmatprep.subr.mxu0 0.0
    %304 = vmatpush1.msra.mxu0 0.0
    %305 = vmatprep.subr.mxu0 0.0
    %306 = vmatpush1.msra.mxu0 0.0
    %307 = vmatprep.subr.mxu0 0.0
    %308 = vmatpush1.msra.mxu0 0.0
    %309 = vmatprep.subr.mxu0 0.0
    %310 = vmatpush1.msra.mxu0 0.0
    %311 = vmatprep.subr.mxu0 0.0
    %312 = vmatpush1.msra.mxu0 0.0
    %313 = vmatprep.subr.mxu0 0.0
    %314 = vmatpush1.msra.mxu0 0.0
    %315 = vmatprep.subr.mxu0 0.0
    %316 = vmatpush1.msra.mxu0 0.0
    %317 = vmatprep.mubr.f32.mxu0 0.0
    %318 = vmatmul.mubr.f32.gmra.mrb[0].mxu0 %v229
    %v319 = vpop.f32.mrb[0].mxu0
    %v320 = vadd.f32 %v251, %v319
    %v321 = vpop.f32.mrb[0].mxu0
    %322 = vdwg.mxu0
    %v323 = vmax.f32 %v320, 0.0
    %v324 = vld [vmem:[#allocation5 + $0x18] sm:$0xff]
    %v325 = vld [vmem:[#allocation5 + $0x38] sm:$0xff]
    %v326 = vld [vmem:[#allocation5 + $0x58] sm:$0xff]
    %v327 = vld [vmem:[#allocation5 + $0x78] sm:$0xff]
    %v328 = vld [vmem:[#allocation5 + $0x98] sm:$0xff]
    %v329 = vld [vmem:[#allocation5 + $0xb8] sm:$0xff]
    %v330 = vld [vmem:[#allocation5 + $0xd8] sm:$0xff]
    %v331 = vld [vmem:[#allocation5 + $0xf8] sm:$0xff]
    %v332 = vld [vmem:[#allocation5 + $0x118] sm:$0xff]
    %v333 = vld [vmem:[#allocation5 + $0x138] sm:$0xff]
    %v334 = vld [vmem:[#allocation5 + $0x158] sm:$0xff]
    %v335 = vld [vmem:[#allocation5 + $0x178] sm:$0xff]
    %v336 = vld [vmem:[#allocation5 + $0x198] sm:$0xff]
    %v337 = vld [vmem:[#allocation5 + $0x1b8] sm:$0xff]
    %v338 = vld [vmem:[#allocation5 + $0x1d8] sm:$0xff]
    %v339 = vld [vmem:[#allocation5 + $0x1f8] sm:$0xff]
    %v340 = vld [vmem:[%s2 + $0x3] sm:$0x1]
    %v342 = vlaneseq
    %v343 = vshrl.u32 %v342, 7
    %v344 = vsub.s32 0, %v343
    %v345 = vrot.slane %v340, %v344
    %347 = vmatprep.subr.mxu0 0.0
    %348 = vmatpush1.msra.mxu0 %v324
    %349 = vmatprep.subr.mxu0 0.0
    %350 = vmatpush1.msra.mxu0 %v325
    %351 = vmatprep.subr.mxu0 0.0
    %352 = vmatpush1.msra.mxu0 %v326
    %353 = vmatprep.subr.mxu0 0.0
    %354 = vmatpush1.msra.mxu0 %v327
    %355 = vmatprep.subr.mxu0 0.0
    %356 = vmatpush1.msra.mxu0 %v328
    %357 = vmatprep.subr.mxu0 0.0
    %358 = vmatpush1.msra.mxu0 %v329
    %359 = vmatprep.subr.mxu0 0.0
    %360 = vmatpush1.msra.mxu0 %v330
    %361 = vmatprep.subr.mxu0 0.0
    %362 = vmatpush1.msra.mxu0 %v331
    %363 = vmatprep.subr.mxu0 0.0
    %364 = vmatpush1.msra.mxu0 %v332
    %365 = vmatprep.subr.mxu0 0.0
    %366 = vmatpush1.msra.mxu0 %v333
    %367 = vmatprep.subr.mxu0 0.0
    %368 = vmatpush1.msra.mxu0 %v334
    %369 = vmatprep.subr.mxu0 0.0
    %370 = vmatpush1.msra.mxu0 %v335
    %371 = vmatprep.subr.mxu0 0.0
    %372 = vmatpush1.msra.mxu0 %v336
    %373 = vmatprep.subr.mxu0 0.0
    %374 = vmatpush1.msra.mxu0 %v337
    %375 = vmatprep.subr.mxu0 0.0
    %376 = vmatpush1.msra.mxu0 %v338
    %377 = vmatprep.subr.mxu0 0.0
    %378 = vmatpush1.msra.mxu0 %v339
    %379 = vmatprep.subr.mxu0 0.0
    %380 = vmatpush1.msra.mxu0 0.0
    %381 = vmatprep.subr.mxu0 0.0
    %382 = vmatpush1.msra.mxu0 0.0
    %383 = vmatprep.subr.mxu0 0.0
    %384 = vmatpush1.msra.mxu0 0.0
    %385 = vmatprep.subr.mxu0 0.0
    %386 = vmatpush1.msra.mxu0 0.0
    %387 = vmatprep.subr.mxu0 0.0
    %388 = vmatpush1.msra.mxu0 0.0
    %389 = vmatprep.subr.mxu0 0.0
    %390 = vmatpush1.msra.mxu0 0.0
    %391 = vmatprep.subr.mxu0 0.0
    %392 = vmatpush1.msra.mxu0 0.0
    %393 = vmatprep.subr.mxu0 0.0
    %394 = vmatpush1.msra.mxu0 0.0
    %395 = vmatprep.subr.mxu0 0.0
    %396 = vmatpush1.msra.mxu0 0.0
    %397 = vmatprep.subr.mxu0 0.0
    %398 = vmatpush1.msra.mxu0 0.0
    %399 = vmatprep.subr.mxu0 0.0
    %400 = vmatpush1.msra.mxu0 0.0
    %401 = vmatprep.subr.mxu0 0.0
    %402 = vmatpush1.msra.mxu0 0.0
    %403 = vmatprep.subr.mxu0 0.0
    %404 = vmatpush1.msra.mxu0 0.0
    %405 = vmatprep.subr.mxu0 0.0
    %406 = vmatpush1.msra.mxu0 0.0
    %407 = vmatprep.subr.mxu0 0.0
    %408 = vmatpush1.msra.mxu0 0.0
    %409 = vmatprep.subr.mxu0 0.0
    %410 = vmatpush1.msra.mxu0 0.0
    %411 = vmatprep.mubr.f32.mxu0 0.0
    %412 = vmatmul.mubr.f32.gmra.mrb[0].mxu0 %v323
    %v413 = vpop.f32.mrb[0].mxu0
    %v414 = vadd.f32 %v345, %v413
    %v415 = vpop.f32.mrb[0].mxu0
    %416 = vdwg.mxu0
    %v417 = vtanh.pop %v414
    %418 = vst [vmem:[#allocation7] sm:$0xff] %v417
    // Predicated region
    $region22: #{tpu_custom_call.1} parent=1 // pred_check
      _
    $region23: #{tpu_custom_call.1} parent=1 // pred_check_branch
      %420 = sbr.rel (0) target = $region25
    $region24: #{tpu_custom_call.1} parent=1 // pred_region
      %s422 = ssub.s32 128, 128
      %423 = vsyncadd [#allocation4], %s422
      %s425 = sshll.u32 [#allocation7], 4
      %s426 = int_to_ptr.vmem [resolvable:$true] %s425
      %428 = dma.vmem_to_hbm [thread:$0]  %s426, 128, %s3, [#allocation4]
    $region25: #{tpu_custom_call.1} parent=1 // pred_fallthru
      _
    // Predicated region
    $region26: #{tpu_custom_call.1} parent=1 // pred_check
      _
    $region27: #{tpu_custom_call.1} parent=1 // pred_check_branch
      %430 = sbr.rel (0) target = $region29
    $region28: #{tpu_custom_call.1} parent=1 // pred_region
      %431 = dma.done [#allocation4], 128
    $region29: #{tpu_custom_call.1} parent=1 // pred_fallthru
      _
    %432 = vsyncpa [#allocation3], 1
    %433 = vsyncpa [#allocation6], 1
    %434 = vsyncpa [#allocation4], 1

</llo_original>
